<compile_context>
chip_gen: v7x
topology: tpu7x:2x2x1
jax: 0.10.0
libtpu: 0.0.40
codegen_flags: <defaults>
</compile_context>

<pallas_src>
import functools

import jax
import jax.numpy as jnp
import numpy as np
from jax.experimental import pallas as pl
from jax.experimental.pallas import tpu as pltpu

BN_EPS = 1e-5


def _silu(t):
    # SiLU via one EUP exp + approx reciprocal (cheaper than a full divide).
    return t * pl.reciprocal(1.0 + jnp.exp(-t), approx=True)


def _mv2_block_kernel(x_ref, w1_ref, w3_ref, ph_ref, po_ref, mask_ref, o_ref,
                      *, W: int, use_res: bool):
    """One batch element: x_ref (1, Cin, P) -> o_ref (1, Cout, P), P = H*W.

    ph_ref (hidden, 16): cols 0..8 = s2-folded depthwise taps (t = ky*3+kx),
                          col 9 = b1, col 10 = b2.
    po_ref (Cout, 8):     col 0 = b3.
    mask_ref (4, P):      [col mask dx=-1, col mask dx=+1,
                           row mask dy=-1, row mask dy=+1]  (zero-padding masks)
    """
    P = x_ref.shape[-1]
    x = x_ref[0]                                                       # (Cin, P) f32

    # ---- stage 1: 1x1 expansion conv (BN scale folded) + bias + SiLU ----
    h = jnp.dot(w1_ref[...], x.astype(jnp.bfloat16),
                preferred_element_type=jnp.float32)                    # (hidden, P)
    h = h + ph_ref[:, 9:10]                                            # b1
    h = _silu(h)

    # ---- stage 2: separable depthwise 3x3 (stride 1, pad 1) ----
    wdw = ph_ref[:, 0:9]                                               # (hidden, 9)
    colm = mask_ref[0:1, :]                                            # dx = -1
    colp = mask_ref[1:2, :]                                            # dx = +1
    rowm = mask_ref[2:3, :]                                            # dy = -1
    rowp = mask_ref[3:4, :]                                            # dy = +1

    # Column-shifted copies: h_dx[p=(i,j)] = h[i, j+dx], zero outside the image.
    h_m = colm * pltpu.roll(h, 1, axis=1)                              # dx = -1
    h_p = colp * pltpu.roll(h, P - 1, axis=1)                          # dx = +1

    def s_row(dy_idx):  # per-row tap sum for dy_idx in {0,1,2} <-> dy in {-1,0,+1}
        b = dy_idx * 3
        return (wdw[:, b:b + 1] * h_m
                + wdw[:, b + 1:b + 2] * h
                + wdw[:, b + 2:b + 3] * h_p)

    acc = s_row(1)                                                     # dy = 0
    acc = acc + rowm * pltpu.roll(s_row(0), W, axis=1)                 # dy = -1
    acc = acc + rowp * pltpu.roll(s_row(2), P - W, axis=1)             # dy = +1
    acc = acc + ph_ref[:, 10:11]                                       # b2
    acc = _silu(acc)

    # ---- stage 3: 1x1 projection conv (BN scale folded) + bias (+ residual) ----
    out = jnp.dot(w3_ref[...], acc.astype(jnp.bfloat16),
                  preferred_element_type=jnp.float32)                  # (Cout, P)
    out = out + po_ref[:, 0:1]                                         # b3
    if use_res:
        out = out + x
    o_ref[0] = out.astype(o_ref.dtype)


def _make_masks(H, W):
    """(4, H*W) {0,1} masks: col dx=-1, col dx=+1, row dy=-1, row dy=+1."""
    j = np.arange(W)
    i = np.arange(H)
    col_m = (j - 1 >= 0).astype(np.float32)
    col_p = (j + 1 <= W - 1).astype(np.float32)
    row_m = (i - 1 >= 0).astype(np.float32)
    row_p = (i + 1 <= H - 1).astype(np.float32)
    return jnp.asarray(np.stack([np.tile(col_m, H),
                                 np.tile(col_p, H),
                                 np.repeat(row_m, W),
                                 np.repeat(row_p, W)]))


def mv2_block_forward(x_nchw, kernel_params, *, stride=1, use_res_connect=True):
    """NCHW in / NCHW out, matching the PyTorch module (eval-mode BatchNorm)."""
    # TODO(synk): stride=2 depthwise subsampling and the expansion==1 variant
    # are not implemented (this covers the default expansion=4, stride=1 path).
    assert stride == 1
    w1, w3, ph, po = kernel_params

    B, Cin, H, W = x_nchw.shape
    hidden = w1.shape[0]
    Cout = w3.shape[0]
    P = H * W

    x = x_nchw.reshape(B, Cin, P)          # NCHW flattened; no transposes anywhere
    masks = _make_masks(H, W)

    kernel = functools.partial(_mv2_block_kernel, W=W, use_res=use_res_connect)

    # Explicit VMEM budget: live f32 slabs per step (~6 hidden-wide) + double-
    # buffered x/out blocks + params, with headroom; floored at the 32 MiB default.
    live_bytes = (6 * hidden + 4 * (Cin + Cout)) * P * 4
    param_bytes = (hidden * Cin + Cout * hidden) * 2 + (hidden * 16 + Cout * 8 + 4 * P) * 4
    vmem_limit = int(min(max(live_bytes * 2 + param_bytes * 2 + (8 << 20), 32 << 20),
                         100 << 20))

    # Advisory cost hint (this block is bandwidth/overhead bound at these shapes).
    flops = 2 * B * P * hidden * (Cin + Cout) + 30 * B * P * hidden
    transcendentals = 4 * B * P * hidden           # exp + reciprocal per SiLU, x2
    bytes_accessed = (B * Cin * P + B * Cout * P) * 4 + param_bytes + int(masks.size) * 4

    out = pl.pallas_call(
        kernel,
        out_shape=jax.ShapeDtypeStruct((B, Cout, P), x_nchw.dtype),
        grid_spec=pltpu.PrefetchScalarGridSpec(
            num_scalar_prefetch=0,
            grid=(B,),
            in_specs=[
                pl.BlockSpec((1, Cin, P), lambda b: (b, 0, 0)),
                pl.BlockSpec((hidden, Cin), lambda b: (0, 0)),
                pl.BlockSpec((Cout, hidden), lambda b: (0, 0)),
                pl.BlockSpec((hidden, 16), lambda b: (0, 0)),
                pl.BlockSpec((Cout, 8), lambda b: (0, 0)),
                pl.BlockSpec((4, P), lambda b: (0, 0)),
            ],
            out_specs=pl.BlockSpec((1, Cout, P), lambda b: (b, 0, 0)),
        ),
        compiler_params=pltpu.CompilerParams(
            dimension_semantics=("parallel",),
            vmem_limit_bytes=vmem_limit),
        cost_estimate=pl.CostEstimate(flops=flops,
                                      transcendentals=transcendentals,
                                      bytes_accessed=bytes_accessed),
    )(x, w1, w3, ph, po, masks)

    return out.reshape(B, Cout, H, W)


# ---------------- parameter setup (deterministic, synthetic) ----------------

def init_torch_like_params(key, inp, oup, expansion=4):
    """Parameters in PyTorch layout (conv weights, BN per-channel running stats)."""
    hidden = int(inp * expansion)
    k = jax.random.split(key, 16)
    p = {}
    p["w1"] = jax.random.normal(k[0], (hidden, inp), jnp.float32) * 0.2      # Conv2d(inp,hidden,1)
    p["bn1"] = (0.5 + jax.random.uniform(k[1], (hidden,), jnp.float32),      # gamma
                jax.random.normal(k[2], (hidden,), jnp.float32) * 0.1,       # beta
                jax.random.normal(k[3], (hidden,), jnp.float32) * 0.1,       # running_mean
                0.5 + jax.random.uniform(k[4], (hidden,), jnp.float32))      # running_var
    p["wdw"] = jax.random.normal(k[5], (hidden, 3, 3), jnp.float32) * 0.2    # depthwise (hidden,1,3,3)
    p["bn2"] = (0.5 + jax.random.uniform(k[6], (hidden,), jnp.float32),
                jax.random.normal(k[7], (hidden,), jnp.float32) * 0.1,
                jax.random.normal(k[8], (hidden,), jnp.float32) * 0.1,
                0.5 + jax.random.uniform(k[9], (hidden,), jnp.float32))
    p["w3"] = jax.random.normal(k[10], (oup, hidden), jnp.float32) * 0.2     # Conv2d(hidden,oup,1)
    p["bn3"] = (0.5 + jax.random.uniform(k[11], (oup,), jnp.float32),
                jax.random.normal(k[12], (oup,), jnp.float32) * 0.1,
                jax.random.normal(k[13], (oup,), jnp.float32) * 0.1,
                0.5 + jax.random.uniform(k[14], (oup,), jnp.float32))
    return p


def _fold_bn(gamma, beta, mean, var):
    scale = gamma / jnp.sqrt(var + BN_EPS)
    bias = beta - mean * scale
    return scale, bias                       # 1-D (C,)


def fold_params_for_kernel(p):
    """PyTorch-layout params -> kernel layout: BN scales folded into weights,
    bf16 matmul weights, per-channel bias/taps packed into two small arrays."""
    hidden = p["w1"].shape[0]
    cout = p["w3"].shape[0]
    s1, b1 = _fold_bn(*p["bn1"])
    s2, b2 = _fold_bn(*p["bn2"])
    s3, b3 = _fold_bn(*p["bn3"])

    w1 = (p["w1"] * s1[:, None]).astype(jnp.bfloat16)        # (hidden, Cin), scale-folded
    w3 = (p["w3"] * s3[:, None]).astype(jnp.bfloat16)        # (Cout, hidden), scale-folded
    wdw = p["wdw"].reshape(hidden, 9) * s2[:, None]          # (hidden, 9), scale-folded, f32

    ph = jnp.zeros((hidden, 16), jnp.float32)
    ph = ph.at[:, 0:9].set(wdw).at[:, 9].set(b1).at[:, 10].set(b2)
    po = jnp.zeros((cout, 8), jnp.float32).at[:, 0].set(b3)
    return (w1, w3, ph, po)


# ---------------- pure-JAX reference (for sanity checking) ----------------

def ref_forward(x_nchw, p, use_res):
    hidden = p["w1"].shape[0]
    s1, b1 = _fold_bn(*p["bn1"])
    s2, b2 = _fold_bn(*p["bn2"])
    s3, b3 = _fold_bn(*p["bn3"])

    def bn(t, s, b):
        return t * s[None, :, None, None] + b[None, :, None, None]

    h = jnp.einsum("bchw,oc->bohw", x_nchw, p["w1"])
    h = bn(h, s1, b1)
    h = h * jax.nn.sigmoid(h)
    d = jax.lax.conv_general_dilated(
        h, p["wdw"][:, None, :, :], (1, 1), ((1, 1), (1, 1)),
        dimension_numbers=("NCHW", "OIHW", "NCHW"), feature_group_count=hidden)
    d = bn(d, s2, b2)
    d = d * jax.nn.sigmoid(d)
    o = jnp.einsum("bchw,oc->bohw", d, p["w3"])
    o = bn(o, s3, b3)
    if use_res:
        o = o + x_nchw
    return o


if __name__ == "__main__":
    inp, oup, stride, expansion = 4, 4, 1, 4
    B, H, W = 2, 16, 16

    key = jax.random.PRNGKey(0)
    kx, kp = jax.random.split(key)
    x = jax.random.normal(kx, (B, inp, H, W), jnp.float32)        # NCHW like PyTorch

    torch_params = init_torch_like_params(kp, inp, oup, expansion)
    kernel_params = fold_params_for_kernel(torch_params)
    use_res = (stride == 1 and inp == oup)

    y = mv2_block_forward(x, kernel_params, stride=stride, use_res_connect=use_res)
    y = jax.block_until_ready(y)

    y_ref = ref_forward(x, torch_params, use_res)
    # Tolerance accounts for bf16 MXU operands (f32 accumulation) and the
    # approx-reciprocal SiLU.
    np.testing.assert_allclose(np.asarray(y), np.asarray(y_ref), rtol=2e-2, atol=2e-2)

    print("KERNEL_OK")
</pallas_src>

<mosaic_0001>
module attributes {stable_mosaic.version = 11 : i64} {
  func.func @_mv2_block_kernel(%arg0: i32, %arg1: memref<1x4x256xf32, #tpu.memory_space<vmem>>, %arg2: memref<16x4xbf16, #tpu.memory_space<vmem>>, %arg3: memref<4x16xbf16, #tpu.memory_space<vmem>>, %arg4: memref<16x16xf32, #tpu.memory_space<vmem>>, %arg5: memref<4x8xf32, #tpu.memory_space<vmem>>, %arg6: memref<4x256xf32, #tpu.memory_space<vmem>>, %arg7: memref<1x4x256xf32, #tpu.memory_space<vmem>>) attributes {dimension_semantics = [#tpu.dimension_semantics<parallel>], iteration_bounds = array<i64: 2>, scalar_prefetch = 0 : i64, scratch_operands = 0 : i64, tpu.core_type = #tpu.core_type<tc>, window_params = [{transform_indices = @transform_0, window_bounds = array<i64: 1, 4, 256>}, {pipeline_mode = #tpu.pipeline_mode<synchronous>, transform_indices = @transform_1, window_bounds = array<i64: 16, 4>}, {pipeline_mode = #tpu.pipeline_mode<synchronous>, transform_indices = @transform_2, window_bounds = array<i64: 4, 16>}, {pipeline_mode = #tpu.pipeline_mode<synchronous>, transform_indices = @transform_3, window_bounds = array<i64: 16, 16>}, {pipeline_mode = #tpu.pipeline_mode<synchronous>, transform_indices = @transform_4, window_bounds = array<i64: 4, 8>}, {pipeline_mode = #tpu.pipeline_mode<synchronous>, transform_indices = @transform_5, window_bounds = array<i64: 4, 256>}, {transform_indices = @transform_6, window_bounds = array<i64: 1, 4, 256>}]} {
    %c0 = arith.constant 0 : index
    %c0_0 = arith.constant 0 : index
    %c0_1 = arith.constant 0 : index
    %0 = vector.load %arg1[%c0, %c0_0, %c0_1] : memref<1x4x256xf32, #tpu.memory_space<vmem>>, vector<1x4x256xf32>
    %1 = vector.shape_cast %0 : vector<1x4x256xf32> to vector<4x256xf32>
    %c0_2 = arith.constant 0 : index
    %c0_3 = arith.constant 0 : index
    %2 = vector.load %arg2[%c0_2, %c0_3] : memref<16x4xbf16, #tpu.memory_space<vmem>>, vector<16x4xbf16>
    %3 = arith.truncf %1 : vector<4x256xf32> to vector<4x256xbf16>
    %cst = arith.constant dense<0.000000e+00> : vector<16x256xf32>
    %4 = tpu.matmul %2, %3, %cst {dimension_numbers = #tpu.dot_dimension_numbers<[1], [0], [0], [1], [0, 0, 1, 1], [], []>} : vector<16x4xbf16>, vector<4x256xbf16>, vector<16x256xf32> -> vector<16x256xf32>
    %c0_4 = arith.constant 0 : index
    %c9 = arith.constant 9 : index
    %5 = vector.load %arg4[%c0_4, %c9] : memref<16x16xf32, #tpu.memory_space<vmem>>, vector<16x1xf32>
    %6 = vector.broadcast %5 : vector<16x1xf32> to vector<16x256xf32>
    %7 = arith.addf %4, %6 : vector<16x256xf32>
    %cst_5 = arith.constant 0.000000e+00 : f32
    %8 = vector.broadcast %cst_5 : f32 to vector<16x256xf32>
    %9 = arith.subf %8, %7 : vector<16x256xf32>
    %10 = math.exp %9 : vector<16x256xf32>
    %cst_6 = arith.constant 1.000000e+00 : f32
    %11 = vector.broadcast %cst_6 : f32 to vector<16x256xf32>
    %12 = arith.addf %11, %10 : vector<16x256xf32>
    %13 = tpu.reciprocal %12 {approx = true} : vector<16x256xf32> -> vector<16x256xf32>
    %14 = arith.mulf %7, %13 : vector<16x256xf32>
    %c0_7 = arith.constant 0 : index
    %c0_8 = arith.constant 0 : index
    %15 = vector.load %arg4[%c0_7, %c0_8] : memref<16x16xf32, #tpu.memory_space<vmem>>, vector<16x9xf32>
    %c0_9 = arith.constant 0 : index
    %c0_10 = arith.constant 0 : index
    %16 = vector.load %arg6[%c0_9, %c0_10] : memref<4x256xf32, #tpu.memory_space<vmem>>, vector<1x256xf32>
    %c1 = arith.constant 1 : index
    %c0_11 = arith.constant 0 : index
    %17 = vector.load %arg6[%c1, %c0_11] : memref<4x256xf32, #tpu.memory_space<vmem>>, vector<1x256xf32>
    %c2 = arith.constant 2 : index
    %c0_12 = arith.constant 0 : index
    %18 = vector.load %arg6[%c2, %c0_12] : memref<4x256xf32, #tpu.memory_space<vmem>>, vector<1x256xf32>
    %c3 = arith.constant 3 : index
    %c0_13 = arith.constant 0 : index
    %19 = vector.load %arg6[%c3, %c0_13] : memref<4x256xf32, #tpu.memory_space<vmem>>, vector<1x256xf32>
    %c1_i32 = arith.constant 1 : i32
    %20 = tpu.dynamic_rotate %14 by %c1_i32 dim 1 : vector<16x256xf32>, i32 -> vector<16x256xf32>
    %21 = vector.broadcast %16 : vector<1x256xf32> to vector<16x256xf32>
    %22 = arith.mulf %21, %20 : vector<16x256xf32>
    %c255_i32 = arith.constant 255 : i32
    %23 = tpu.dynamic_rotate %14 by %c255_i32 dim 1 : vector<16x256xf32>, i32 -> vector<16x256xf32>
    %24 = vector.broadcast %17 : vector<1x256xf32> to vector<16x256xf32>
    %25 = arith.mulf %24, %23 : vector<16x256xf32>
    %26 = vector.extract_strided_slice %15 {offsets = [0, 3], sizes = [16, 1], strides = [1, 1]} : vector<16x9xf32> to vector<16x1xf32>
    %27 = vector.broadcast %26 : vector<16x1xf32> to vector<16x256xf32>
    %28 = arith.mulf %27, %22 : vector<16x256xf32>
    %29 = vector.extract_strided_slice %15 {offsets = [0, 4], sizes = [16, 1], strides = [1, 1]} : vector<16x9xf32> to vector<16x1xf32>
    %30 = vector.broadcast %29 : vector<16x1xf32> to vector<16x256xf32>
    %31 = arith.mulf %30, %14 : vector<16x256xf32>
    %32 = arith.addf %28, %31 : vector<16x256xf32>
    %33 = vector.extract_strided_slice %15 {offsets = [0, 5], sizes = [16, 1], strides = [1, 1]} : vector<16x9xf32> to vector<16x1xf32>
    %34 = vector.broadcast %33 : vector<16x1xf32> to vector<16x256xf32>
    %35 = arith.mulf %34, %25 : vector<16x256xf32>
    %36 = arith.addf %32, %35 : vector<16x256xf32>
    %37 = vector.extract_strided_slice %15 {offsets = [0, 0], sizes = [16, 1], strides = [1, 1]} : vector<16x9xf32> to vector<16x1xf32>
    %38 = vector.broadcast %37 : vector<16x1xf32> to vector<16x256xf32>
    %39 = arith.mulf %38, %22 : vector<16x256xf32>
    %40 = vector.extract_strided_slice %15 {offsets = [0, 1], sizes = [16, 1], strides = [1, 1]} : vector<16x9xf32> to vector<16x1xf32>
    %41 = vector.broadcast %40 : vector<16x1xf32> to vector<16x256xf32>
    %42 = arith.mulf %41, %14 : vector<16x256xf32>
    %43 = arith.addf %39, %42 : vector<16x256xf32>
    %44 = vector.extract_strided_slice %15 {offsets = [0, 2], sizes = [16, 1], strides = [1, 1]} : vector<16x9xf32> to vector<16x1xf32>
    %45 = vector.broadcast %44 : vector<16x1xf32> to vector<16x256xf32>
    %46 = arith.mulf %45, %25 : vector<16x256xf32>
    %47 = arith.addf %43, %46 : vector<16x256xf32>
    %c16_i32 = arith.constant 16 : i32
    %48 = tpu.dynamic_rotate %47 by %c16_i32 dim 1 : vector<16x256xf32>, i32 -> vector<16x256xf32>
    %49 = vector.broadcast %18 : vector<1x256xf32> to vector<16x256xf32>
    %50 = arith.mulf %49, %48 : vector<16x256xf32>
    %51 = arith.addf %36, %50 : vector<16x256xf32>
    %52 = vector.extract_strided_slice %15 {offsets = [0, 6], sizes = [16, 1], strides = [1, 1]} : vector<16x9xf32> to vector<16x1xf32>
    %53 = vector.broadcast %52 : vector<16x1xf32> to vector<16x256xf32>
    %54 = arith.mulf %53, %22 : vector<16x256xf32>
    %55 = vector.extract_strided_slice %15 {offsets = [0, 7], sizes = [16, 1], strides = [1, 1]} : vector<16x9xf32> to vector<16x1xf32>
    %56 = vector.broadcast %55 : vector<16x1xf32> to vector<16x256xf32>
    %57 = arith.mulf %56, %14 : vector<16x256xf32>
    %58 = arith.addf %54, %57 : vector<16x256xf32>
    %59 = vector.extract_strided_slice %15 {offsets = [0, 8], sizes = [16, 1], strides = [1, 1]} : vector<16x9xf32> to vector<16x1xf32>
    %60 = vector.broadcast %59 : vector<16x1xf32> to vector<16x256xf32>
    %61 = arith.mulf %60, %25 : vector<16x256xf32>
    %62 = arith.addf %58, %61 : vector<16x256xf32>
    %c240_i32 = arith.constant 240 : i32
    %63 = tpu.dynamic_rotate %62 by %c240_i32 dim 1 : vector<16x256xf32>, i32 -> vector<16x256xf32>
    %64 = vector.broadcast %19 : vector<1x256xf32> to vector<16x256xf32>
    %65 = arith.mulf %64, %63 : vector<16x256xf32>
    %66 = arith.addf %51, %65 : vector<16x256xf32>
    %c0_14 = arith.constant 0 : index
    %c10 = arith.constant 10 : index
    %67 = vector.load %arg4[%c0_14, %c10] : memref<16x16xf32, #tpu.memory_space<vmem>>, vector<16x1xf32>
    %68 = vector.broadcast %67 : vector<16x1xf32> to vector<16x256xf32>
    %69 = arith.addf %66, %68 : vector<16x256xf32>
    %cst_15 = arith.constant 0.000000e+00 : f32
    %70 = vector.broadcast %cst_15 : f32 to vector<16x256xf32>
    %71 = arith.subf %70, %69 : vector<16x256xf32>
    %72 = math.exp %71 : vector<16x256xf32>
    %cst_16 = arith.constant 1.000000e+00 : f32
    %73 = vector.broadcast %cst_16 : f32 to vector<16x256xf32>
    %74 = arith.addf %73, %72 : vector<16x256xf32>
    %75 = tpu.reciprocal %74 {approx = true} : vector<16x256xf32> -> vector<16x256xf32>
    %76 = arith.mulf %69, %75 : vector<16x256xf32>
    %c0_17 = arith.constant 0 : index
    %c0_18 = arith.constant 0 : index
    %77 = vector.load %arg3[%c0_17, %c0_18] : memref<4x16xbf16, #tpu.memory_space<vmem>>, vector<4x16xbf16>
    %78 = arith.truncf %76 : vector<16x256xf32> to vector<16x256xbf16>
    %cst_19 = arith.constant dense<0.000000e+00> : vector<4x256xf32>
    %79 = tpu.matmul %77, %78, %cst_19 {dimension_numbers = #tpu.dot_dimension_numbers<[1], [0], [0], [1], [0, 0, 1, 1], [], []>} : vector<4x16xbf16>, vector<16x256xbf16>, vector<4x256xf32> -> vector<4x256xf32>
    %c0_20 = arith.constant 0 : index
    %c0_21 = arith.constant 0 : index
    %80 = vector.load %arg5[%c0_20, %c0_21] : memref<4x8xf32, #tpu.memory_space<vmem>>, vector<4x1xf32>
    %81 = vector.broadcast %80 : vector<4x1xf32> to vector<4x256xf32>
    %82 = arith.addf %79, %81 : vector<4x256xf32>
    %83 = arith.addf %82, %1 : vector<4x256xf32>
    %c0_22 = arith.constant 0 : index
    %c0_23 = arith.constant 0 : index
    %c0_24 = arith.constant 0 : index
    %84 = vector.load %arg7[%c0_22, %c0_23, %c0_24] : memref<1x4x256xf32, #tpu.memory_space<vmem>>, vector<1x4x256xf32>
    %85 = vector.shape_cast %84 : vector<1x4x256xf32> to vector<4x256xf32>
    %86 = vector.shape_cast %83 : vector<4x256xf32> to vector<1x4x256xf32>
    tpu.vector_store %arg7[%c0_22, %c0_23, %c0_24], %86 {strides = array<i32>} : memref<1x4x256xf32, #tpu.memory_space<vmem>>, vector<1x4x256xf32>,
    return
  }
  func.func @transform_0(%arg0: i32) -> (i32, i32, i32) {
    %c0_i32 = arith.constant 0 : i32
    %c0_i32_0 = arith.constant 0 : i32
    %c0_i32_1 = arith.constant 0 : i32
    return %arg0, %c0_i32, %c0_i32_0 : i32, i32, i32
  }
  func.func @transform_1(%arg0: i32) -> (i32, i32) {
    %c0_i32 = arith.constant 0 : i32
    %c0_i32_0 = arith.constant 0 : i32
    %c0_i32_1 = arith.constant 0 : i32
    return %c0_i32, %c0_i32_0 : i32, i32
  }
  func.func @transform_2(%arg0: i32) -> (i32, i32) {
    %c0_i32 = arith.constant 0 : i32
    %c0_i32_0 = arith.constant 0 : i32
    %c0_i32_1 = arith.constant 0 : i32
    return %c0_i32, %c0_i32_0 : i32, i32
  }
  func.func @transform_3(%arg0: i32) -> (i32, i32) {
    %c0_i32 = arith.constant 0 : i32
    %c0_i32_0 = arith.constant 0 : i32
    %c0_i32_1 = arith.constant 0 : i32
    return %c0_i32, %c0_i32_0 : i32, i32
  }
  func.func @transform_4(%arg0: i32) -> (i32, i32) {
    %c0_i32 = arith.constant 0 : i32
    %c0_i32_0 = arith.constant 0 : i32
    %c0_i32_1 = arith.constant 0 : i32
    return %c0_i32, %c0_i32_0 : i32, i32
  }
  func.func @transform_5(%arg0: i32) -> (i32, i32) {
    %c0_i32 = arith.constant 0 : i32
    %c0_i32_0 = arith.constant 0 : i32
    %c0_i32_1 = arith.constant 0 : i32
    return %c0_i32, %c0_i32_0 : i32, i32
  }
  func.func @transform_6(%arg0: i32) -> (i32, i32, i32) {
    %c0_i32 = arith.constant 0 : i32
    %c0_i32_0 = arith.constant 0 : i32
    %c0_i32_1 = arith.constant 0 : i32
    return %arg0, %c0_i32, %c0_i32_0 : i32, i32, i32
  }
}

</mosaic_0001>

<llo_original>
// kernel: tpu_custom_call.1
$region0: #{tpu_custom_call.1}
  #allocation0 [shape = 'u32[]', space=smem, size = 0x4, offset = 0x4, fixed_abs, tag = 'smem constant byte address 0x4 - core index']
  #allocation1 [shape = 'u32[144,128]{1,0:T(1,128)}', space=vmem, size = 0x12000, scoped, tag = 'internal scratch']
  %s0 = inlined_call_operand.hbm [shape: f32[2,4,256], index: 0, kind: input, shape index: {}]
  %s1 = inlined_call_operand.vmem [shape: bf16[16,4], index: 1, kind: input, shape index: {}]
  %s2 = inlined_call_operand.vmem [shape: bf16[4,16], index: 2, kind: input, shape index: {}]
  %s3 = inlined_call_operand.hbm [shape: f32[16,16], index: 3, kind: input, shape index: {}]
  %s4 = inlined_call_operand.vmem [shape: f32[4,8], index: 4, kind: input, shape index: {}]
  %s5 = inlined_call_operand.vmem [shape: f32[4,256], index: 5, kind: input, shape index: {}]
  %s6 = inlined_call_operand.hbm [shape: f32[2,4,256], index: 6, kind: output, shape index: {}]
  %s7 = sld [smem:[#allocation0]]
  $region65: #{tpu_custom_call.1} parent=0
    _
  %s9 = ssub.s32 1, %s7
  %s10 = scalar_select 0, %s9, %s7
  $region1: #{tpu_custom_call.1} parent=0
    #allocation2 [shape = 'u8[8192]{0}', space=vmem, size = 0x2000, scoped, tag = 'input window, operand 0']
    #allocation3 [shape = 's32[2]{0}', space=sflag, size = 0x8, scoped, tag = 'scoped memory for tpu_custom_call.1']
    #allocation4 [shape = 's32[2]{0}', space=sflag, size = 0x8, scoped, tag = 'scoped memory for tpu_custom_call.1']
    #allocation5 [shape = 'u8[8192]{0}', space=vmem, size = 0x2000, scoped, tag = 'input window, operand 3, single buffered']
    #allocation6 [shape = 's32[1]{0}', space=sflag, size = 0x4, scoped, tag = 'scoped memory for tpu_custom_call.1']
    #allocation7 [shape = 'u8[8192]{0}', space=vmem, size = 0x2000, scoped, tag = 'output window, operand 0']
    %11 = vsyncpa [#allocation3], 0
    %s12 = scalar_lea.sflag [#allocation3], 1
    %13 = vsyncpa %s12, 0
    %14 = vsyncpa [#allocation6], 0
    %15 = vsyncpa [#allocation4], 0
    %s16 = scalar_lea.sflag [#allocation4], 1
    %17 = vsyncpa %s16, 0
    loop: start=0, step=1, limit=4
    $region2: #{tpu_custom_call.1} parent=1 // loop_pre_header
      _
    $region3: #{tpu_custom_call.1} parent=1 // loop_header
      %s19 = sphi 0, %s23
      %p20 = scmp.ge.s32.totalorder %s19, 4
      %s29 = sphi 0, %s31
      %s32 = sphi 0, %s29
      %s33 = sphi 0, %s32
      %s49 = sphi 0, %s33
      %s53 = sphi 0, %s53
      %s55 = sphi 0, %s53
      %s56 = sphi 0, %s55
      %s70 = sphi 0, %s56
      %s74 = sphi 0, %s74
      %s76 = sphi 0, %s74
      %s77 = sphi 0, %s76
      %s91 = sphi 0, %s77
      %s95 = sphi 0, %s95
      %s97 = sphi 0, %s95
      %s98 = sphi 0, %s97
      %s112 = sphi 0, %s98
      %s116 = sphi 0, %s116
      %s118 = sphi 0, %s116
      %s119 = sphi 0, %s118
      %s133 = sphi 0, %s119
      %s137 = sphi 0, %s137
      %s139 = sphi 0, %s137
      %s140 = sphi 0, %s139
      %s154 = sphi 0, %s140
      %s160 = sphi 0, %s162
      %s163 = sphi 0, %s160
      %s164 = sphi 0, %s163
      %s180 = sphi 0, %s164
    $region4: #{tpu_custom_call.1} parent=1 // loop_header_branch
      %22 = sbr.rel (%p20) target = $region8
    $region5: #{tpu_custom_call.1} parent=1 // loop_body
      %s24 = ssub.s32 %s19, 1
      %s25 = ssub.s32 %s19, 2
      %s26 = sadd.s32 %s19, 1
      %s27 = ssub.s32 %s19, %s26
      %p28 = scmp.eq.s32.totalorder %s27, 0
      %s30 = sadd.s32 %s29, 1
      %s31 = scalar_select %p28, %s29, %s30
      %p34 = pneg %p28
      %p35 = scmp.eq.s32.totalorder %s19, 1
      %p36 = por %p34, %p35
      %p37 = scmp.ne.s32.totalorder %s29, %s32
      %p38 = scmp.eq.s32.totalorder %s19, 0
      %p39 = por %p37, %p38
      %p40 = scmp.ne.s32.totalorder %s29, %s32
      %p41 = scmp.eq.s32.totalorder %s24, 1
      %p42 = por %p40, %p41
      %p43 = scmp.ne.s32.totalorder %s32, %s33
      %p44 = scmp.eq.s32.totalorder %s24, 0
      %p45 = por %p43, %p44
      %p46 = scmp.ne.s32.totalorder %s32, %s33
      %p47 = scmp.eq.s32.totalorder %s25, 1
      %p48 = por %p46, %p47
      %p50 = scmp.ne.s32.totalorder %s33, %s49
      %p51 = scmp.eq.s32.totalorder %s25, 0
      %p52 = por %p50, %p51
      %s54 = sadd.s32 %s53, 1
      %p57 = scmp.eq.s32.totalorder %s19, 1
      %p58 = scmp.ne.s32.totalorder %s53, %s55
      %p59 = scmp.eq.s32.totalorder %s19, 0
      %p60 = por %p58, %p59
      %p61 = scmp.ne.s32.totalorder %s53, %s55
      %p62 = scmp.eq.s32.totalorder %s24, 1
      %p63 = por %p61, %p62
      %p64 = scmp.ne.s32.totalorder %s55, %s56
      %p65 = scmp.eq.s32.totalorder %s24, 0
      %p66 = por %p64, %p65
      %p67 = scmp.ne.s32.totalorder %s55, %s56
      %p68 = scmp.eq.s32.totalorder %s25, 1
      %p69 = por %p67, %p68
      %p71 = scmp.ne.s32.totalorder %s56, %s70
      %p72 = scmp.eq.s32.totalorder %s25, 0
      %p73 = por %p71, %p72
      %s75 = sadd.s32 %s74, 1
      %p78 = scmp.eq.s32.totalorder %s19, 1
      %p79 = scmp.ne.s32.totalorder %s74, %s76
      %p80 = scmp.eq.s32.totalorder %s19, 0
      %p81 = por %p79, %p80
      %p82 = scmp.ne.s32.totalorder %s74, %s76
      %p83 = scmp.eq.s32.totalorder %s24, 1
      %p84 = por %p82, %p83
      %p85 = scmp.ne.s32.totalorder %s76, %s77
      %p86 = scmp.eq.s32.totalorder %s24, 0
      %p87 = por %p85, %p86
      %p88 = scmp.ne.s32.totalorder %s76, %s77
      %p89 = scmp.eq.s32.totalorder %s25, 1
      %p90 = por %p88, %p89
      %p92 = scmp.ne.s32.totalorder %s77, %s91
      %p93 = scmp.eq.s32.totalorder %s25, 0
      %p94 = por %p92, %p93
      %s96 = sadd.s32 %s95, 1
      %p99 = scmp.eq.s32.totalorder %s19, 1
      %p100 = scmp.ne.s32.totalorder %s95, %s97
      %p101 = scmp.eq.s32.totalorder %s19, 0
      %p102 = por %p100, %p101
      %p103 = scmp.ne.s32.totalorder %s95, %s97
      %p104 = scmp.eq.s32.totalorder %s24, 1
      %p105 = por %p103, %p104
      %p106 = scmp.ne.s32.totalorder %s97, %s98
      %p107 = scmp.eq.s32.totalorder %s24, 0
      %p108 = por %p106, %p107
      %p109 = scmp.ne.s32.totalorder %s97, %s98
      %p110 = scmp.eq.s32.totalorder %s25, 1
      %p111 = por %p109, %p110
      %p113 = scmp.ne.s32.totalorder %s98, %s112
      %p114 = scmp.eq.s32.totalorder %s25, 0
      %p115 = por %p113, %p114
      %s117 = sadd.s32 %s116, 1
      %p120 = scmp.eq.s32.totalorder %s19, 1
      %p121 = scmp.ne.s32.totalorder %s116, %s118
      %p122 = scmp.eq.s32.totalorder %s19, 0
      %p123 = por %p121, %p122
      %p124 = scmp.ne.s32.totalorder %s116, %s118
      %p125 = scmp.eq.s32.totalorder %s24, 1
      %p126 = por %p124, %p125
      %p127 = scmp.ne.s32.totalorder %s118, %s119
      %p128 = scmp.eq.s32.totalorder %s24, 0
      %p129 = por %p127, %p128
      %p130 = scmp.ne.s32.totalorder %s118, %s119
      %p131 = scmp.eq.s32.totalorder %s25, 1
      %p132 = por %p130, %p131
      %p134 = scmp.ne.s32.totalorder %s119, %s133
      %p135 = scmp.eq.s32.totalorder %s25, 0
      %p136 = por %p134, %p135
      %s138 = sadd.s32 %s137, 1
      %p141 = scmp.eq.s32.totalorder %s19, 1
      %p142 = scmp.ne.s32.totalorder %s137, %s139
      %p143 = scmp.eq.s32.totalorder %s19, 0
      %p144 = por %p142, %p143
      %p145 = scmp.ne.s32.totalorder %s137, %s139
      %p146 = scmp.eq.s32.totalorder %s24, 1
      %p147 = por %p145, %p146
      %p148 = scmp.ne.s32.totalorder %s139, %s140
      %p149 = scmp.eq.s32.totalorder %s24, 0
      %p150 = por %p148, %p149
      %p151 = scmp.ne.s32.totalorder %s139, %s140
      %p152 = scmp.eq.s32.totalorder %s25, 1
      %p153 = por %p151, %p152
      %p155 = scmp.ne.s32.totalorder %s140, %s154
      %p156 = scmp.eq.s32.totalorder %s25, 0
      %p157 = por %p155, %p156
      %s158 = ssub.s32 %s19, %s26
      %p159 = scmp.eq.s32.totalorder %s158, 0
      %s161 = sadd.s32 %s160, 1
      %s162 = scalar_select %p159, %s160, %s161
      %p165 = pneg %p159
      %p166 = scmp.eq.s32.totalorder %s19, 1
      %p167 = por %p165, %p166
      %p168 = scmp.ne.s32.totalorder %s160, %s163
      %p169 = scmp.eq.s32.totalorder %s19, 0
      %p170 = por %p168, %p169
      %p171 = scmp.ne.s32.totalorder %s160, %s163
      %p172 = scmp.eq.s32.totalorder %s24, 1
      %p173 = por %p171, %p172
      %p174 = scmp.ne.s32.totalorder %s163, %s164
      %p175 = scmp.eq.s32.totalorder %s24, 0
      %p176 = por %p174, %p175
      %p177 = scmp.ne.s32.totalorder %s163, %s164
      %p178 = scmp.eq.s32.totalorder %s25, 1
      %p179 = por %p177, %p178
      %p181 = scmp.ne.s32.totalorder %s164, %s180
      %p182 = scmp.eq.s32.totalorder %s25, 0
      %p183 = por %p181, %p182
      %p184 = scmp.le.s32.totalorder 1, %s19
      %p185 = scmp.lt.s32.totalorder %s19, 3
      %p186 = pnand %p184, %p185
      %p187 = pneg %p186
      // Predicated region
      $region9: #{tpu_custom_call.1} parent=5 // pred_check
        _
      $region10: #{tpu_custom_call.1} parent=5 // pred_check_branch
        %189 = sbr.rel (%p186) target = $region12
      $region11: #{tpu_custom_call.1} parent=5 // pred_region
        %s190 = ssub.s32 %s19, 1
        // Predicated region
        $region13: #{tpu_custom_call.1} parent=11 // pred_check
          %p191 = pneg %p66
        $region14: #{tpu_custom_call.1} parent=11 // pred_check_branch
          %193 = sbr.rel (%p191) target = $region16
        $region15: #{tpu_custom_call.1} parent=11 // pred_region
          _
        $region16: #{tpu_custom_call.1} parent=11 // pred_fallthru
          _
        // Predicated region
        $region17: #{tpu_custom_call.1} parent=11 // pred_check
          %p194 = pneg %p87
        $region18: #{tpu_custom_call.1} parent=11 // pred_check_branch
          %196 = sbr.rel (%p194) target = $region20
        $region19: #{tpu_custom_call.1} parent=11 // pred_region
          _
        $region20: #{tpu_custom_call.1} parent=11 // pred_fallthru
          _
        // Predicated region
        $region21: #{tpu_custom_call.1} parent=11 // pred_check
          %p197 = pneg %p108
        $region22: #{tpu_custom_call.1} parent=11 // pred_check_branch
          %199 = sbr.rel (%p197) target = $region24
        $region23: #{tpu_custom_call.1} parent=11 // pred_region
          %s201 = ssub.s32 256, 256
          %202 = vsyncadd [#allocation6], %s201
          %s203 = sshll.u32 [#allocation5], 4
          %s204 = int_to_ptr.vmem [resolvable:$true] %s203
          %209 = dma.hbm_to_vmem [thread:$0]  %s3, 256, %s204, [#allocation6], 128, 128, 8
        $region24: #{tpu_custom_call.1} parent=11 // pred_fallthru
          _
        // Predicated region
        $region25: #{tpu_custom_call.1} parent=11 // pred_check
          %p210 = pneg %p129
        $region26: #{tpu_custom_call.1} parent=11 // pred_check_branch
          %212 = sbr.rel (%p210) target = $region28
        $region27: #{tpu_custom_call.1} parent=11 // pred_region
          _
        $region28: #{tpu_custom_call.1} parent=11 // pred_fallthru
          _
        // Predicated region
        $region29: #{tpu_custom_call.1} parent=11 // pred_check
          %p213 = pneg %p150
        $region30: #{tpu_custom_call.1} parent=11 // pred_check_branch
          %215 = sbr.rel (%p213) target = $region32
        $region31: #{tpu_custom_call.1} parent=11 // pred_region
          _
        $region32: #{tpu_custom_call.1} parent=11 // pred_fallthru
          _
      $region12: #{tpu_custom_call.1} parent=5 // pred_fallthru
        _
      %p216 = scmp.lt.s32.totalorder %s19, 2
      // Predicated region
      $region33: #{tpu_custom_call.1} parent=5 // pred_check
        %p217 = pneg %p216
      $region34: #{tpu_custom_call.1} parent=5 // pred_check_branch
        %219 = sbr.rel (%p217) target = $region36
      $region35: #{tpu_custom_call.1} parent=5 // pred_region
        // Predicated region
        $region37: #{tpu_custom_call.1} parent=35 // pred_check
          %p220 = pneg %p39
        $region38: #{tpu_custom_call.1} parent=35 // pred_check_branch
          %222 = sbr.rel (%p220) target = $region40
        $region39: #{tpu_custom_call.1} parent=35 // pred_region
          %s223 = sand.u32 %s29, 1
          %s224 = scalar_lea.sflag [#allocation3], %s223
          %s225 = sand.u32 %s29, 1
          %s226 = smul.addr %s225, 8
          %s227 = scalar_lea.vmem [#allocation2], %s226
          %s229 = ssub.s32 128, 128
          %230 = vsyncadd %s224, %s229
          %s231 = smul.addr %s19, 2
          %s232 = smul.addr %s231, 64
          %s233 = scalar_lea.hbm %s0, %s232
          %s235 = sshll.u32 %s227, 4
          %s236 = int_to_ptr.vmem [resolvable:$true] %s235
          %238 = dma.hbm_to_vmem [thread:$0]  %s233, 128, %s236, %s224
        $region40: #{tpu_custom_call.1} parent=35 // pred_fallthru
          _
      $region36: #{tpu_custom_call.1} parent=5 // pred_fallthru
        _
      %p239 = scmp.le.s32.totalorder 1, %s19
      %p240 = scmp.lt.s32.totalorder %s19, 3
      %p241 = pnand %p239, %p240
      %p242 = pneg %p241
      // Predicated region
      $region41: #{tpu_custom_call.1} parent=5 // pred_check
        _
      $region42: #{tpu_custom_call.1} parent=5 // pred_check_branch
        %244 = sbr.rel (%p241) target = $region44
      $region43: #{tpu_custom_call.1} parent=5 // pred_region
        %s245 = ssub.s32 %s19, 1
        %s246 = sand.u32 %s32, 1
        %s247 = scalar_lea.sflag [#allocation3], %s246
        %s248 = sand.u32 %s32, 1
        %s249 = smul.addr %s248, 8
        %s250 = scalar_lea.vmem [#allocation2], %s249
        // Predicated region
        $region45: #{tpu_custom_call.1} parent=43 // pred_check
          %p251 = pneg %p45
        $region46: #{tpu_custom_call.1} parent=43 // pred_check_branch
          %253 = sbr.rel (%p251) target = $region48
        $region47: #{tpu_custom_call.1} parent=43 // pred_region
          %254 = dma.done %s247, 128
        $region48: #{tpu_custom_call.1} parent=43 // pred_fallthru
          _
        // Predicated region
        $region49: #{tpu_custom_call.1} parent=43 // pred_check
          %p255 = pneg %p108
        $region50: #{tpu_custom_call.1} parent=43 // pred_check_branch
          %257 = sbr.rel (%p255) target = $region52
        $region51: #{tpu_custom_call.1} parent=43 // pred_region
          %258 = dma.done [#allocation6], 256
        $region52: #{tpu_custom_call.1} parent=43 // pred_fallthru
          _
        %s259 = sand.u32 %s32, 1
        %s260 = scalar_lea.sflag [#allocation3], %s259
        %s261 = sand.u32 %s32, 1
        %s262 = smul.addr %s261, 8
        %s263 = scalar_lea.vmem [#allocation2], %s262
        %p264 = pneg %p45
        %p265 = pneg %p42
        %p266 = pneg %p66
        %p267 = pneg %p63
        %p268 = pneg %p87
        %p269 = pneg %p84
        %p270 = pneg %p108
        %p271 = pneg %p105
        %p272 = pneg %p129
        %p273 = pneg %p126
        %p274 = pneg %p150
        %p275 = pneg %p147
        %p276 = pneg %p176
        %p277 = pneg %p173
        %s278 = sand.u32 %s163, 1
        %s279 = scalar_lea.sflag [#allocation4], %s278
        %s280 = sand.u32 %s163, 1
        %s281 = smul.addr %s280, 8
        %s282 = scalar_lea.vmem [#allocation7], %s281
        %v284 = vld [vmem:[%s250] sm:$0xff]
        %v285 = vld [vmem:[%s1] sm:$0xf]
        %v286 = vld [vmem:[%s1 + $0x4] sm:$0xf]
        %v288 = vcombine.high %v284, %v284
        %v290 = vpack.c.bf16 %v284, %v284
        %v291 = vpack.c.bf16 %v288, %v288
        %v292 = vld [vmem:[#allocation5] sm:$0xff]
        %v293 = vld [vmem:[#allocation5 + $0x8] sm:$0xff]
        %295 = vset.pattern.permute.xlu0 9
        %296 = vperm.xlu0 %295, %v292
        %v297 = vpop.permute.xlu0 %296
        %300 = vset.pattern.permute.xlu0 9
        %301 = vperm.xlu0 %300, %v293
        %v302 = vpop.permute.xlu0 %301
        %v306 = vunpack.c.l.b16 %v285
        %v307 = vunpack.c.l.b16 %v286
        %v308 = vpack.c.b16 %v307, %v306
        %vm309 = vcmask 31744
        %v311 = vsel %vm309, %v308, 0
        %vm313 = vcmask 1041408
        %v315 = vsel %vm313, %v290, 0
        %v318 = vsel %vm313, %v291, 0
        %320 = vmatprep.subr.bf16.mxu0 %v318
        %321 = vmatpush1.bf16.msra.mxu0 %v315
        %322 = vmatprep.subr.bf16.mxu0 0
        %323 = vmatpush1.bf16.msra.mxu0 0
        %324 = vmatprep.subr.bf16.mxu0 0
        %325 = vmatpush1.bf16.msra.mxu0 0
        %326 = vmatprep.subr.bf16.mxu0 0
        %327 = vmatpush1.bf16.msra.mxu0 0
        %328 = vmatprep.subr.bf16.mxu0 0
        %329 = vmatpush1.bf16.msra.mxu0 0
        %330 = vmatprep.subr.bf16.mxu0 0
        %331 = vmatpush1.bf16.msra.mxu0 0
        %332 = vmatprep.subr.bf16.mxu0 0
        %333 = vmatpush1.bf16.msra.mxu0 0
        %334 = vmatprep.subr.bf16.mxu0 0
        %335 = vmatpush1.bf16.msra.mxu0 0
        %336 = vmatprep.subr.bf16.mxu0 0
        %337 = vmatpush1.bf16.msra.mxu0 0
        %338 = vmatprep.subr.bf16.mxu0 0
        %339 = vmatpush1.bf16.msra.mxu0 0
        %340 = vmatprep.subr.bf16.mxu0 0
        %341 = vmatpush1.bf16.msra.mxu0 0
        %342 = vmatprep.subr.bf16.mxu0 0
        %343 = vmatpush1.bf16.msra.mxu0 0
        %344 = vmatprep.subr.bf16.mxu0 0
        %345 = vmatpush1.bf16.msra.mxu0 0
        %346 = vmatprep.subr.bf16.mxu0 0
        %347 = vmatpush1.bf16.msra.mxu0 0
        %348 = vmatprep.subr.bf16.mxu0 0
        %349 = vmatpush1.bf16.msra.mxu0 0
        %350 = vmatprep.subr.bf16.mxu0 0
        %351 = vmatpush1.bf16.msra.mxu0 0
        %352 = vmatprep.mubr.bf16.mxu0 0
        %353 = vmatmul.mubr.bf16.gmra.mrb[0].mxu0 %v311
        %v354 = vpop.f32.mrb[0].mxu0
        %v355 = vadd.f32 %v297, %v354
        %v356 = vpop.f32.mrb[0].mxu0
        %v357 = vadd.f32 %v297, %v356
        %v358 = vpop.f32.mrb[0].mxu0
        %v359 = vadd.f32 %v302, %v358
        %v360 = vpop.f32.mrb[0].mxu0
        %v361 = vadd.f32 %v302, %v360
        %362 = vdwg.mxu0
        %v363 = vsub.f32 0.0, %v355
        %v364 = vsub.f32 0.0, %v357
        %v365 = vsub.f32 0.0, %v359
        %v366 = vsub.f32 0.0, %v361
        %v367 = vmul.f32 %v363, 1.442695
        %v368 = vpow.pop %v367
        %v369 = vmul.f32 %v364, 1.442695
        %v370 = vpow.pop %v369
        %v371 = vmul.f32 %v365, 1.442695
        %v372 = vpow.pop %v371
        %v373 = vmul.f32 %v366, 1.442695
        %v374 = vpow.pop %v373
        %v375 = vadd.f32 %v368, 1.0
        %v376 = vadd.f32 %v370, 1.0
        %v377 = vadd.f32 %v372, 1.0
        %v378 = vadd.f32 %v374, 1.0
        %v379 = vrcp.pop %v375
        %v380 = vrcp.pop %v376
        %v381 = vrcp.pop %v377
        %v382 = vrcp.pop %v378
        %v383 = vmul.f32 %v355, %v379
        %v384 = vmul.f32 %v357, %v380
        %v385 = vmul.f32 %v359, %v381
        %v386 = vmul.f32 %v361, %v382
        %v387 = vld [vmem:[%s5] ss:$4 sm:$0x3]
        %s388 = scalar_lea.vmem %s5, 1
        %v389 = vld [vmem:[%s388] ss:$4 sm:$0x3]
        %s390 = scalar_lea.vmem %s5, 2
        %v391 = vld [vmem:[%s390] ss:$4 sm:$0x3]
        %s392 = scalar_lea.vmem %s5, 3
        %v393 = vld [vmem:[%s392] ss:$4 sm:$0x3]
        %394 = vrot.lane.b32.xlu0 %v383, 1
        %v395 = vpop.permute.xlu0 %394
        %396 = vrot.lane.b32.xlu0 %v385, 1
        %v397 = vpop.permute.xlu0 %396
        %398 = vrot.lane.b32.xlu0 %v384, 1
        %v399 = vpop.permute.xlu0 %398
        %400 = vrot.lane.b32.xlu0 %v386, 1
        %v401 = vpop.permute.xlu0 %400
        %v402 = vlaneseq
        %v403 = vand.u32 %v402, 127
        %vm404 = vcmp.lt.s32.totalorder %v403, 1
        %v405 = vsel %vm404, %v395, %v399
        %v406 = vsel %vm404, %v397, %v401
        %v407 = vsel %vm404, %v399, %v395
        %v408 = vsel %vm404, %v401, %v397
        %v410 = vlaneseq
        %v411 = vshrl.u32 %v410, 7
        %v412 = vsub.s32 0, %v411
        %v413 = vrot.slane %v387, %v412
        %v414 = vlaneseq
        %v415 = vshrl.u32 %v414, 7
        %v416 = vsub.s32 1, %v415
        %v417 = vrot.slane %v387, %v416
        %v420 = vmul.f32 %v413, %v407
        %v421 = vmul.f32 %v417, %v405
        %v422 = vmul.f32 %v413, %v408
        %v423 = vmul.f32 %v417, %v406
        %424 = vrot.lane.b32.xlu0 %v383, 127
        %v425 = vpop.permute.xlu0 %424
        %426 = vrot.lane.b32.xlu0 %v385, 127
        %v427 = vpop.permute.xlu0 %426
        %428 = vrot.lane.b32.xlu0 %v384, 127
        %v429 = vpop.permute.xlu0 %428
        %430 = vrot.lane.b32.xlu0 %v386, 127
        %v431 = vpop.permute.xlu0 %430
        %vm432 = vcmp.lt.s32.totalorder %v403, 127
        %v433 = vsel %vm432, %v425, %v429
        %v434 = vsel %vm432, %v427, %v431
        %v435 = vsel %vm432, %v429, %v425
        %v436 = vsel %vm432, %v431, %v427
        %v438 = vlaneseq
        %v439 = vshrl.u32 %v438, 7
        %v440 = vsub.s32 0, %v439
        %v441 = vrot.slane %v389, %v440
        %v442 = vlaneseq
        %v443 = vshrl.u32 %v442, 7
        %v444 = vsub.s32 1, %v443
        %v445 = vrot.slane %v389, %v444
        %v448 = vmul.f32 %v441, %v433
        %v449 = vmul.f32 %v445, %v435
        %v450 = vmul.f32 %v441, %v434
        %v451 = vmul.f32 %v445, %v436
        %452 = vset.pattern.permute.xlu0 3
        %453 = vperm.xlu0 %452, %v292
        %v454 = vpop.permute.xlu0 %453
        %456 = vset.pattern.permute.xlu0 3
        %457 = vperm.xlu0 %456, %v293
        %v458 = vpop.permute.xlu0 %457
        %v460 = vmul.f32 %v454, %v420
        %v461 = vmul.f32 %v454, %v421
        %v462 = vmul.f32 %v458, %v422
        %v463 = vmul.f32 %v458, %v423
        %464 = vset.pattern.permute.xlu0 4
        %465 = vperm.xlu0 %464, %v292
        %v466 = vpop.permute.xlu0 %465
        %468 = vset.pattern.permute.xlu0 4
        %469 = vperm.xlu0 %468, %v293
        %v470 = vpop.permute.xlu0 %469
        %v472 = vmul.f32 %v466, %v383
        %v473 = vmul.f32 %v466, %v384
        %v474 = vmul.f32 %v470, %v385
        %v475 = vmul.f32 %v470, %v386
        %v476 = vadd.f32 %v460, %v472
        %v477 = vadd.f32 %v461, %v473
        %v478 = vadd.f32 %v462, %v474
        %v479 = vadd.f32 %v463, %v475
        %480 = vset.pattern.permute.xlu0 5
        %481 = vperm.xlu0 %480, %v292
        %v482 = vpop.permute.xlu0 %481
        %484 = vset.pattern.permute.xlu0 5
        %485 = vperm.xlu0 %484, %v293
        %v486 = vpop.permute.xlu0 %485
        %v488 = vmul.f32 %v482, %v448
        %v489 = vmul.f32 %v482, %v449
        %v490 = vmul.f32 %v486, %v450
        %v491 = vmul.f32 %v486, %v451
        %v492 = vadd.f32 %v476, %v488
        %v493 = vadd.f32 %v477, %v489
        %v494 = vadd.f32 %v478, %v490
        %v495 = vadd.f32 %v479, %v491
        %496 = vset.pattern.permute.xlu0 0
        %497 = vperm.xlu0 %496, %v292
        %v498 = vpop.permute.xlu0 %497
        %500 = vset.pattern.permute.xlu0 0
        %501 = vperm.xlu0 %500, %v293
        %v502 = vpop.permute.xlu0 %501
        %v504 = vmul.f32 %v498, %v420
        %v505 = vmul.f32 %v498, %v421
        %v506 = vmul.f32 %v502, %v422
        %v507 = vmul.f32 %v502, %v423
        %508 = vset.pattern.permute.xlu0 1
        %509 = vperm.xlu0 %508, %v292
        %v510 = vpop.permute.xlu0 %509
        %512 = vset.pattern.permute.xlu0 1
        %513 = vperm.xlu0 %512, %v293
        %v514 = vpop.permute.xlu0 %513
        %v516 = vmul.f32 %v510, %v383
        %v517 = vmul.f32 %v510, %v384
        %v518 = vmul.f32 %v514, %v385
        %v519 = vmul.f32 %v514, %v386
        %v520 = vadd.f32 %v504, %v516
        %v521 = vadd.f32 %v505, %v517
        %v522 = vadd.f32 %v506, %v518
        %v523 = vadd.f32 %v507, %v519
        %524 = vset.pattern.permute.xlu0 2
        %525 = vperm.xlu0 %524, %v292
        %v526 = vpop.permute.xlu0 %525
        %528 = vset.pattern.permute.xlu0 2
        %529 = vperm.xlu0 %528, %v293
        %v530 = vpop.permute.xlu0 %529
        %v532 = vmul.f32 %v526, %v448
        %v533 = vmul.f32 %v526, %v449
        %v534 = vmul.f32 %v530, %v450
        %v535 = vmul.f32 %v530, %v451
        %v536 = vadd.f32 %v520, %v532
        %v537 = vadd.f32 %v521, %v533
        %v538 = vadd.f32 %v522, %v534
        %v539 = vadd.f32 %v523, %v535
        %540 = vrot.lane.b32.xlu0 %v536, 16
        %v541 = vpop.permute.xlu0 %540
        %542 = vrot.lane.b32.xlu0 %v538, 16
        %v543 = vpop.permute.xlu0 %542
        %544 = vrot.lane.b32.xlu0 %v537, 16
        %v545 = vpop.permute.xlu0 %544
        %546 = vrot.lane.b32.xlu0 %v539, 16
        %v547 = vpop.permute.xlu0 %546
        %vm548 = vcmp.lt.s32.totalorder %v403, 16
        %v549 = vsel %vm548, %v541, %v545
        %v550 = vsel %vm548, %v543, %v547
        %v551 = vsel %vm548, %v545, %v541
        %v552 = vsel %vm548, %v547, %v543
        %v554 = vlaneseq
        %v555 = vshrl.u32 %v554, 7
        %v556 = vsub.s32 0, %v555
        %v557 = vrot.slane %v391, %v556
        %v558 = vlaneseq
        %v559 = vshrl.u32 %v558, 7
        %v560 = vsub.s32 1, %v559
        %v561 = vrot.slane %v391, %v560
        %v564 = vmul.f32 %v557, %v551
        %v565 = vmul.f32 %v561, %v549
        %v566 = vmul.f32 %v557, %v552
        %v567 = vmul.f32 %v561, %v550
        %v568 = vadd.f32 %v492, %v564
        %v569 = vadd.f32 %v493, %v565
        %v570 = vadd.f32 %v494, %v566
        %v571 = vadd.f32 %v495, %v567
        %572 = vset.pattern.permute.xlu0 6
        %573 = vperm.xlu0 %572, %v292
        %v574 = vpop.permute.xlu0 %573
        %576 = vset.pattern.permute.xlu0 6
        %577 = vperm.xlu0 %576, %v293
        %v578 = vpop.permute.xlu0 %577
        %v580 = vmul.f32 %v574, %v420
        %v581 = vmul.f32 %v574, %v421
        %v582 = vmul.f32 %v578, %v422
        %v583 = vmul.f32 %v578, %v423
        %584 = vset.pattern.permute.xlu0 7
        %585 = vperm.xlu0 %584, %v292
        %v586 = vpop.permute.xlu0 %585
        %588 = vset.pattern.permute.xlu0 7
        %589 = vperm.xlu0 %588, %v293
        %v590 = vpop.permute.xlu0 %589
        %v592 = vmul.f32 %v586, %v383
        %v593 = vmul.f32 %v586, %v384
        %v594 = vmul.f32 %v590, %v385
        %v595 = vmul.f32 %v590, %v386
        %v596 = vadd.f32 %v580, %v592
        %v597 = vadd.f32 %v581, %v593
        %v598 = vadd.f32 %v582, %v594
        %v599 = vadd.f32 %v583, %v595
        %600 = vset.pattern.permute.xlu0 8
        %601 = vperm.xlu0 %600, %v292
        %v602 = vpop.permute.xlu0 %601
        %604 = vset.pattern.permute.xlu0 8
        %605 = vperm.xlu0 %604, %v293
        %v606 = vpop.permute.xlu0 %605
        %v608 = vmul.f32 %v602, %v448
        %v609 = vmul.f32 %v602, %v449
        %v610 = vmul.f32 %v606, %v450
        %v611 = vmul.f32 %v606, %v451
        %v612 = vadd.f32 %v596, %v608
        %v613 = vadd.f32 %v597, %v609
        %v614 = vadd.f32 %v598, %v610
        %v615 = vadd.f32 %v599, %v611
        %616 = vrot.lane.b32.xlu0 %v612, 112
        %v617 = vpop.permute.xlu0 %616
        %618 = vrot.lane.b32.xlu0 %v614, 112
        %v619 = vpop.permute.xlu0 %618
        %620 = vrot.lane.b32.xlu0 %v613, 112
        %v621 = vpop.permute.xlu0 %620
        %622 = vrot.lane.b32.xlu0 %v615, 112
        %v623 = vpop.permute.xlu0 %622
        %vm624 = vcmp.lt.s32.totalorder %v403, 112
        %v625 = vsel %vm624, %v617, %v621
        %v626 = vsel %vm624, %v619, %v623
        %v627 = vsel %vm624, %v621, %v617
        %v628 = vsel %vm624, %v623, %v619
        %v630 = vlaneseq
        %v631 = vshrl.u32 %v630, 7
        %v632 = vsub.s32 0, %v631
        %v633 = vrot.slane %v393, %v632
        %v634 = vlaneseq
        %v635 = vshrl.u32 %v634, 7
        %v636 = vsub.s32 1, %v635
        %v637 = vrot.slane %v393, %v636
        %v640 = vmul.f32 %v633, %v625
        %v641 = vmul.f32 %v637, %v627
        %v642 = vmul.f32 %v633, %v626
        %v643 = vmul.f32 %v637, %v628
        %v644 = vadd.f32 %v568, %v640
        %v645 = vadd.f32 %v569, %v641
        %v646 = vadd.f32 %v570, %v642
        %v647 = vadd.f32 %v571, %v643
        %648 = vset.pattern.permute.xlu0 10
        %649 = vperm.xlu0 %648, %v292
        %v650 = vpop.permute.xlu0 %649
        %652 = vset.pattern.permute.xlu0 10
        %653 = vperm.xlu0 %652, %v293
        %v654 = vpop.permute.xlu0 %653
        %v656 = vadd.f32 %v644, %v650
        %v657 = vadd.f32 %v645, %v650
        %v658 = vadd.f32 %v646, %v654
        %v659 = vadd.f32 %v647, %v654
        %v660 = vsub.f32 0.0, %v656
        %v661 = vsub.f32 0.0, %v657
        %v662 = vsub.f32 0.0, %v658
        %v663 = vsub.f32 0.0, %v659
        %v664 = vmul.f32 %v660, 1.442695
        %v665 = vpow.pop %v664
        %v666 = vmul.f32 %v661, 1.442695
        %v667 = vpow.pop %v666
        %v668 = vmul.f32 %v662, 1.442695
        %v669 = vpow.pop %v668
        %v670 = vmul.f32 %v663, 1.442695
        %v671 = vpow.pop %v670
        %v672 = vadd.f32 %v665, 1.0
        %v673 = vadd.f32 %v667, 1.0
        %v674 = vadd.f32 %v669, 1.0
        %v675 = vadd.f32 %v671, 1.0
        %v676 = vrcp.pop %v672
        %v677 = vrcp.pop %v673
        %v678 = vrcp.pop %v674
        %v679 = vrcp.pop %v675
        %v680 = vmul.f32 %v656, %v676
        %v681 = vmul.f32 %v657, %v677
        %v682 = vmul.f32 %v658, %v678
        %v683 = vmul.f32 %v659, %v679
        %v684 = vld [vmem:[%s2] sm:$0x3]
        %v685 = vpack.c.bf16 %v682, %v680
        %v686 = vpack.c.bf16 %v683, %v681
        %v687 = vld [vmem:[%s4] sm:$0xf]
        %689 = vset.pattern.permute.xlu0 0
        %690 = vperm.xlu0 %689, %v687
        %v691 = vpop.permute.xlu0 %690
        %vm693 = vcmask 130048
        %v695 = vsel %vm693, %v684, 0
        %697 = vmatprep.subr.bf16.mxu0 %v686
        %698 = vmatpush1.bf16.msra.mxu0 %v685
        %699 = vmatprep.subr.bf16.mxu0 0
        %700 = vmatpush1.bf16.msra.mxu0 0
        %701 = vmatprep.subr.bf16.mxu0 0
        %702 = vmatpush1.bf16.msra.mxu0 0
        %703 = vmatprep.subr.bf16.mxu0 0
        %704 = vmatpush1.bf16.msra.mxu0 0
        %705 = vmatprep.subr.bf16.mxu0 0
        %706 = vmatpush1.bf16.msra.mxu0 0
        %707 = vmatprep.subr.bf16.mxu0 0
        %708 = vmatpush1.bf16.msra.mxu0 0
        %709 = vmatprep.subr.bf16.mxu0 0
        %710 = vmatpush1.bf16.msra.mxu0 0
        %711 = vmatprep.subr.bf16.mxu0 0
        %712 = vmatpush1.bf16.msra.mxu0 0
        %713 = vmatprep.subr.bf16.mxu0 0
        %714 = vmatpush1.bf16.msra.mxu0 0
        %715 = vmatprep.subr.bf16.mxu0 0
        %716 = vmatpush1.bf16.msra.mxu0 0
        %717 = vmatprep.subr.bf16.mxu0 0
        %718 = vmatpush1.bf16.msra.mxu0 0
        %719 = vmatprep.subr.bf16.mxu0 0
        %720 = vmatpush1.bf16.msra.mxu0 0
        %721 = vmatprep.subr.bf16.mxu0 0
        %722 = vmatpush1.bf16.msra.mxu0 0
        %723 = vmatprep.subr.bf16.mxu0 0
        %724 = vmatpush1.bf16.msra.mxu0 0
        %725 = vmatprep.subr.bf16.mxu0 0
        %726 = vmatpush1.bf16.msra.mxu0 0
        %727 = vmatprep.subr.bf16.mxu0 0
        %728 = vmatpush1.bf16.msra.mxu0 0
        %729 = vmatprep.mubr.bf16.mxu0 0
        %730 = vmatmul.mubr.bf16.gmra.mrb[0].mxu0 %v695
        %v731 = vpop.f32.mrb[0].mxu0
        %v732 = vadd.f32 %v691, %v731
        %v733 = vpop.f32.mrb[0].mxu0
        %v734 = vadd.f32 %v691, %v733
        %v735 = vpop.f32.mrb[0].mxu0
        %v736 = vpop.f32.mrb[0].mxu0
        %737 = vdwg.mxu0
        %v738 = vadd.f32 %v732, %v284
        %v739 = vadd.f32 %v734, %v288
        %v742 = vcombine.low %v738, %v739
        %744 = vst [vmem:[%s282] sm:$0xff] %v742
        %s745 = sand.u32 %s163, 1
        %s746 = scalar_lea.sflag [#allocation4], %s745
        %s747 = sand.u32 %s163, 1
        %s748 = smul.addr %s747, 8
        %s749 = scalar_lea.vmem [#allocation7], %s748
        // Predicated region
        $region53: #{tpu_custom_call.1} parent=43 // pred_check
          %p750 = pneg %p173
        $region54: #{tpu_custom_call.1} parent=43 // pred_check_branch
          %752 = sbr.rel (%p750) target = $region56
        $region55: #{tpu_custom_call.1} parent=43 // pred_region
          %s754 = ssub.s32 128, 128
          %755 = vsyncadd %s746, %s754
          %s756 = smul.addr %s24, 2
          %s757 = smul.addr %s756, 64
          %s758 = scalar_lea.hbm %s6, %s757
          %s760 = sshll.u32 %s749, 4
          %s761 = int_to_ptr.vmem [resolvable:$true] %s760
          %763 = dma.vmem_to_hbm [thread:$0]  %s761, 128, %s758, %s746
        $region56: #{tpu_custom_call.1} parent=43 // pred_fallthru
          _
      $region44: #{tpu_custom_call.1} parent=5 // pred_fallthru
        _
      %p764 = scmp.le.s32.totalorder 2, %s19
      // Predicated region
      $region57: #{tpu_custom_call.1} parent=5 // pred_check
        %p765 = pneg %p764
      $region58: #{tpu_custom_call.1} parent=5 // pred_check_branch
        %767 = sbr.rel (%p765) target = $region60
      $region59: #{tpu_custom_call.1} parent=5 // pred_region
        %s768 = ssub.s32 %s19, 2
        // Predicated region
        $region61: #{tpu_custom_call.1} parent=59 // pred_check
          %p769 = pneg %p179
        $region62: #{tpu_custom_call.1} parent=59 // pred_check_branch
          %771 = sbr.rel (%p769) target = $region64
        $region63: #{tpu_custom_call.1} parent=59 // pred_region
          %s772 = sand.u32 %s164, 1
          %s773 = scalar_lea.sflag [#allocation4], %s772
          %s774 = sand.u32 %s164, 1
          %s775 = smul.addr %s774, 8
          %s776 = scalar_lea.vmem [#allocation7], %s775
          %777 = dma.done %s773, 128
        $region64: #{tpu_custom_call.1} parent=59 // pred_fallthru
          _
      $region60: #{tpu_custom_call.1} parent=5 // pred_fallthru
        _
    $region6: #{tpu_custom_call.1} parent=1 // loop_footer
      %s23 = sadd.s32 1, %s19
    $region7: #{tpu_custom_call.1} parent=1 // loop_footer_branch
      %18 = sbr.rel target = $region3
    $region8: #{tpu_custom_call.1} parent=1 // loop_exit
      _
    %778 = vsyncpa [#allocation3], 1
    %s779 = scalar_lea.sflag [#allocation3], 1
    %780 = vsyncpa %s779, 1
    %781 = vsyncpa [#allocation6], 1
    %782 = vsyncpa [#allocation4], 1
    %s783 = scalar_lea.sflag [#allocation4], 1
    %784 = vsyncpa %s783, 1

</llo_original>
